<compile_context>
chip_gen: v7x
topology: tpu7x:2x2x1
jax: 0.10.0
libtpu: 0.0.40
codegen_flags: <defaults>
</compile_context>

<pallas_src>
import math

import numpy as np
import jax
import jax.numpy as jnp
from jax.experimental import pallas as pl
from jax.experimental.pallas import tpu as pltpu


def _round_up(x, m):
    return ((x + m - 1) // m) * m


# -----------------------------------------------------------------------------
# Fixed sinusoidal table (same construction as the PyTorch __init__).
# -----------------------------------------------------------------------------
def fixed_embedding_table(c_in, d_model, dtype=jnp.float32):
    position = jnp.arange(c_in, dtype=jnp.float32)[:, None]                 # (c_in, 1)
    div_term = jnp.exp(jnp.arange(0, d_model, 2, dtype=jnp.float32)
                       * (-math.log(10000.0) / d_model))                    # (ceil(d/2),)
    ang = position * div_term                                               # (c_in, ceil(d/2))
    w = jnp.zeros((c_in, d_model), jnp.float32)
    w = w.at[:, 0::2].set(jnp.sin(ang))
    w = w.at[:, 1::2].set(jnp.cos(ang[:, : d_model // 2]))
    return w.astype(dtype)


# -----------------------------------------------------------------------------
# Kernel: one-hot MXU gather of TB embedding rows per grid step.
# -----------------------------------------------------------------------------
def _embed_gather_kernel(idx_ref, w_ref, o_ref):
    idx = idx_ref[0]                                        # (1, TB)  int32, lane-dense
    w = w_ref[...]                                          # (C_pad, D_pad) f32, VMEM-resident
    c_pad = w_ref.shape[0]
    tb = idx.shape[1]

    # onehot[c, t] = (c == idx[t]); built on the VPU, contraction runs on the MXU.
    row_ids = jax.lax.broadcasted_iota(jnp.int32, (c_pad, tb), 0)
    onehot = (row_ids == idx).astype(w.dtype)               # (C_pad, TB), exact {0,1}

    # out[t, d] = sum_c onehot[c, t] * w[c, d]   (contract C_pad)
    out = jax.lax.dot_general(onehot, w, (((0,), (0,)), ((), ())),
                              preferred_element_type=jnp.float32)
    o_ref[...] = out.astype(o_ref.dtype)                    # (TB, D_pad) full lane-dense store


# -----------------------------------------------------------------------------
# Wrapper: pad table / indices, run the grid over token blocks, un-pad.
# -----------------------------------------------------------------------------
def fixed_embedding_lookup(x, table, *, block_tokens=512):
    """x: integer array of any shape; table: (c_in, d_model) float32.
    Returns an array of shape x.shape + (d_model,), equal to table[x]."""
    c_in, d_model = table.shape
    c_pad = _round_up(c_in, 8)
    d_pad = _round_up(d_model, 128)
    w_pad = jnp.zeros((c_pad, d_pad), table.dtype).at[:c_in, :d_model].set(table)

    orig_shape = x.shape
    idx_flat = x.reshape(-1).astype(jnp.int32)
    n = idx_flat.shape[0]

    tb = min(block_tokens, _round_up(n, 8))
    tb = _round_up(tb, 8)                                   # sublane-aligned token block
    n_pad = _round_up(n, tb)
    idx_flat = jnp.pad(idx_flat, (0, n_pad - n))            # pad with index 0 (a valid row)
    num_blocks = n_pad // tb
    idx_blocks = idx_flat.reshape(num_blocks, 1, tb)        # lane-dense index layout

    out = pl.pallas_call(
        _embed_gather_kernel,
        out_shape=jax.ShapeDtypeStruct((n_pad, d_pad), table.dtype),
        grid_spec=pltpu.PrefetchScalarGridSpec(
            num_scalar_prefetch=0,
            grid=(num_blocks,),
            in_specs=[pl.BlockSpec((1, 1, tb), lambda i: (i, 0, 0)),        # indices, per block
                      pl.BlockSpec((c_pad, d_pad), lambda i: (0, 0))],      # table, VMEM-resident
            out_specs=pl.BlockSpec((tb, d_pad), lambda i: (i, 0))),
        compiler_params=pltpu.CompilerParams(
            dimension_semantics=("parallel",)),             # lets v7x shard blocks over 2 TCs
    )(idx_blocks, w_pad)

    out = out[:n, :d_model].reshape(*orig_shape, d_model)
    # .detach() analogue: the table is a fixed, non-trainable constant.
    return jax.lax.stop_gradient(out)


def fixed_embedding_forward(x, c_in, d_model):
    """Mirrors FixedEmbedding(c_in, d_model).forward(x)."""
    table = fixed_embedding_table(c_in, d_model)
    return fixed_embedding_lookup(x, table)


# -----------------------------------------------------------------------------
if __name__ == "__main__":
    key = jax.random.PRNGKey(0)
    k1, k2 = jax.random.split(key)

    # Small shapes consistent with the module: batch=2, seq=16,
    # vocabulary (c_in)=24 (e.g. hour-of-day), d_model=64.
    B, L = 2, 16
    c_in, d_model = 24, 64
    x = jax.random.randint(k1, (B, L), 0, c_in, dtype=jnp.int32)

    out = fixed_embedding_forward(x, c_in, d_model)
    out = jax.block_until_ready(out)
    assert out.shape == (B, L, d_model)

    # Pure-JAX reference check (embedding lookup of the fixed table).
    table = fixed_embedding_table(c_in, d_model)
    ref = jnp.take(table, x, axis=0)
    np.testing.assert_allclose(np.asarray(out), np.asarray(ref), rtol=1e-6, atol=1e-6)

    # Second check exercising the multi-block grid + token-padding path.
    x2 = jax.random.randint(k2, (3, 350), 0, c_in, dtype=jnp.int32)   # 1050 tokens -> 3 blocks
    out2 = jax.block_until_ready(fixed_embedding_forward(x2, c_in, d_model))
    ref2 = jnp.take(table, x2, axis=0)
    np.testing.assert_allclose(np.asarray(out2), np.asarray(ref2), rtol=1e-6, atol=1e-6)

    print("KERNEL_OK")
</pallas_src>

<mosaic_0001>
module attributes {stable_mosaic.version = 11 : i64} {
  func.func @_embed_gather_kernel(%arg0: i32, %arg1: memref<1x1x32xi32, #tpu.memory_space<vmem>>, %arg2: memref<24x128xf32, #tpu.memory_space<vmem>>, %arg3: memref<32x128xf32, #tpu.memory_space<vmem>>) attributes {dimension_semantics = [#tpu.dimension_semantics<parallel>], iteration_bounds = array<i64: 1>, scalar_prefetch = 0 : i64, scratch_operands = 0 : i64, tpu.core_type = #tpu.core_type<tc>, window_params = [{transform_indices = @transform_0, window_bounds = array<i64: 1, 1, 32>}, {pipeline_mode = #tpu.pipeline_mode<synchronous>, transform_indices = @transform_1, window_bounds = array<i64: 24, 128>}, {transform_indices = @transform_2, window_bounds = array<i64: 32, 128>}]} {
    %c0 = arith.constant 0 : index
    %c0_0 = arith.constant 0 : index
    %c0_1 = arith.constant 0 : index
    %0 = vector.load %arg1[%c0, %c0_0, %c0_1] : memref<1x1x32xi32, #tpu.memory_space<vmem>>, vector<1x1x32xi32>
    %1 = vector.shape_cast %0 : vector<1x1x32xi32> to vector<1x32xi32>
    %c0_2 = arith.constant 0 : index
    %c0_3 = arith.constant 0 : index
    %2 = vector.load %arg2[%c0_2, %c0_3] : memref<24x128xf32, #tpu.memory_space<vmem>>, vector<24x128xf32>
    %3 = tpu.iota {dimensions = array<i32: 0>} : vector<24x32xi32>
    %4 = vector.broadcast %1 : vector<1x32xi32> to vector<24x32xi32>
    %5 = arith.cmpi eq, %3, %4 : vector<24x32xi32>
    %6 = arith.extui %5 : vector<24x32xi1> to vector<24x32xi32>
    %7 = arith.sitofp %6 : vector<24x32xi32> to vector<24x32xf32>
    %cst = arith.constant dense<0.000000e+00> : vector<32x128xf32>
    %8 = tpu.matmul %7, %2, %cst {dimension_numbers = #tpu.dot_dimension_numbers<[0], [0], [1], [1], [0, 1, 1, 1], [], []>} : vector<24x32xf32>, vector<24x128xf32>, vector<32x128xf32> -> vector<32x128xf32>
    %c0_4 = arith.constant 0 : index
    %c0_5 = arith.constant 0 : index
    %9 = vector.load %arg3[%c0_4, %c0_5] : memref<32x128xf32, #tpu.memory_space<vmem>>, vector<32x128xf32>
    tpu.vector_store %arg3[%c0_4, %c0_5], %8 {strides = array<i32>} : memref<32x128xf32, #tpu.memory_space<vmem>>, vector<32x128xf32>,
    return
  }
  func.func @transform_0(%arg0: i32) -> (i32, i32, i32) {
    %c0_i32 = arith.constant 0 : i32
    %c0_i32_0 = arith.constant 0 : i32
    %c0_i32_1 = arith.constant 0 : i32
    return %arg0, %c0_i32, %c0_i32_0 : i32, i32, i32
  }
  func.func @transform_1(%arg0: i32) -> (i32, i32) {
    %c0_i32 = arith.constant 0 : i32
    %c0_i32_0 = arith.constant 0 : i32
    %c0_i32_1 = arith.constant 0 : i32
    return %c0_i32, %c0_i32_0 : i32, i32
  }
  func.func @transform_2(%arg0: i32) -> (i32, i32) {
    %c0_i32 = arith.constant 0 : i32
    %c0_i32_0 = arith.constant 0 : i32
    return %arg0, %c0_i32 : i32, i32
  }
}

</mosaic_0001>

<llo_original>
// kernel: tpu_custom_call.1
$region0: #{tpu_custom_call.1}
  #allocation0 [shape = 'u32[]', space=smem, size = 0x4, offset = 0x4, fixed_abs, tag = 'smem constant byte address 0x4 - core index']
  #allocation1 [shape = 'u32[144,128]{1,0:T(1,128)}', space=vmem, size = 0x12000, scoped, tag = 'internal scratch']
  %s0 = inlined_call_operand.hbm [shape: s32[1,1,32], index: 0, kind: input, shape index: {}]
  %s1 = inlined_call_operand.hbm [shape: f32[24,128], index: 1, kind: input, shape index: {}]
  %s2 = inlined_call_operand.hbm [shape: f32[32,128], index: 2, kind: output, shape index: {}]
  %s3 = sld [smem:[#allocation0]]
  $region26: #{tpu_custom_call.1} parent=0
    _
  %s5 = ssub.s32 1, %s3
  %s6 = scalar_select 0, %s5, %s3
  $region1: #{tpu_custom_call.1} parent=0
    #allocation2 [shape = 'u8[512]{0}', space=vmem, size = 0x400, scoped, tag = 'input window, operand 0, single buffered']
    #allocation3 [shape = 's32[1]{0}', space=sflag, size = 0x4, scoped, tag = 'scoped memory for tpu_custom_call.1']
    #allocation4 [shape = 's32[1]{0}', space=sflag, size = 0x4, scoped, tag = 'scoped memory for tpu_custom_call.1']
    #allocation5 [shape = 'u8[12288]{0}', space=vmem, size = 0x3000, scoped, tag = 'input window, operand 1, single buffered']
    #allocation6 [shape = 's32[1]{0}', space=sflag, size = 0x4, scoped, tag = 'scoped memory for tpu_custom_call.1']
    #allocation7 [shape = 'u8[16384]{0}', space=vmem, size = 0x4000, scoped, tag = 'output window, operand 0, single buffered']
    %7 = vsyncpa [#allocation3], 0
    %8 = vsyncpa [#allocation6], 0
    %9 = vsyncpa [#allocation4], 0
    // Predicated region
    $region2: #{tpu_custom_call.1} parent=1 // pred_check
      _
    $region3: #{tpu_custom_call.1} parent=1 // pred_check_branch
      %11 = sbr.rel (0) target = $region5
    $region4: #{tpu_custom_call.1} parent=1 // pred_region
      %s13 = ssub.s32 16, 16
      %14 = vsyncadd [#allocation3], %s13
      %s16 = sshll.u32 [#allocation2], 4
      %s17 = int_to_ptr.vmem [resolvable:$true] %s16
      %19 = dma.hbm_to_vmem [thread:$0]  %s0, 16, %s17, [#allocation3]
    $region5: #{tpu_custom_call.1} parent=1 // pred_fallthru
      _
    // Predicated region
    $region6: #{tpu_custom_call.1} parent=1 // pred_check
      _
    $region7: #{tpu_custom_call.1} parent=1 // pred_check_branch
      %21 = sbr.rel (0) target = $region9
    $region8: #{tpu_custom_call.1} parent=1 // pred_region
      %s23 = ssub.s32 384, 384
      %24 = vsyncadd [#allocation6], %s23
      %s25 = sshll.u32 [#allocation5], 4
      %s26 = int_to_ptr.vmem [resolvable:$true] %s25
      %31 = dma.hbm_to_vmem [thread:$0]  %s1, 384, %s26, [#allocation6], 128, 128, 8
    $region9: #{tpu_custom_call.1} parent=1 // pred_fallthru
      _
    // Predicated region
    $region10: #{tpu_custom_call.1} parent=1 // pred_check
      _
    $region11: #{tpu_custom_call.1} parent=1 // pred_check_branch
      %33 = sbr.rel (0) target = $region13
    $region12: #{tpu_custom_call.1} parent=1 // pred_region
      %34 = dma.done [#allocation3], 16
    $region13: #{tpu_custom_call.1} parent=1 // pred_fallthru
      _
    // Predicated region
    $region14: #{tpu_custom_call.1} parent=1 // pred_check
      _
    $region15: #{tpu_custom_call.1} parent=1 // pred_check_branch
      %36 = sbr.rel (0) target = $region17
    $region16: #{tpu_custom_call.1} parent=1 // pred_region
      %37 = dma.done [#allocation6], 384
    $region17: #{tpu_custom_call.1} parent=1 // pred_fallthru
      _
    %v38 = vld [vmem:[#allocation2] sm:$0x1]
    %v39 = vld [vmem:[#allocation5] sm:$0xff]
    %v40 = vld [vmem:[#allocation5 + $0x8] sm:$0xff]
    %v41 = vld [vmem:[#allocation5 + $0x10] sm:$0xff]
    %v42 = vlaneseq
    %v43 = vshrl.u32 %v42, 7
    %v44 = vadd.s32 %v43, 8
    %v45 = vadd.s32 %v43, 16
    %v46 = vlaneseq
    %v47 = vshrl.u32 %v46, 7
    %v48 = vsub.s32 0, %v47
    %v49 = vrot.slane %v38, %v48
    %vm50 = vcmp.eq.s32.totalorder %v43, %v49
    %vm51 = vcmp.eq.s32.totalorder %v44, %v49
    %vm52 = vcmp.eq.s32.totalorder %v45, %v49
    %v53 = vsel %vm50, 1, 0
    %v54 = vsel %vm51, 1, 0
    %v55 = vsel %vm52, 1, 0
    %v56 = vcvt.s32.f32 %v53
    %v57 = vcvt.s32.f32 %v54
    %v58 = vcvt.s32.f32 %v55
    %59 = vxpose.xlu0.b32.start [1/16] %v56, 128
    %60 = vxpose.xlu0.b32.cont [2/16] %v57, 128
    %61 = vxpose.xlu0.b32.cont [3/16] %v58, 128
    %62 = vxpose.xlu0.b32.cont [4/16] 0.0, 128
    %63 = vxpose.xlu0.b32.cont [5/16] 0.0, 128
    %64 = vxpose.xlu0.b32.cont [6/16] 0.0, 128
    %65 = vxpose.xlu0.b32.cont [7/16] 0.0, 128
    %66 = vxpose.xlu0.b32.cont [8/16] 0.0, 128
    %67 = vxpose.xlu0.b32.cont [9/16] 0.0, 128
    %68 = vxpose.xlu0.b32.cont [10/16] 0.0, 128
    %69 = vxpose.xlu0.b32.cont [11/16] 0.0, 128
    %70 = vxpose.xlu0.b32.cont [12/16] 0.0, 128
    %71 = vxpose.xlu0.b32.cont [13/16] 0.0, 128
    %72 = vxpose.xlu0.b32.cont [14/16] 0.0, 128
    %73 = vxpose.xlu0.b32.cont [15/16] 0.0, 128
    %74 = vxpose.xlu0.b32.end [16/16] 0.0, 128
    %v75 = vpop.trf.xlu0
    %v76 = vpop.trf.xlu0
    %v77 = vpop.trf.xlu0
    %v78 = vpop.trf.xlu0
    %v79 = vpop.trf.xlu0
    %v80 = vpop.trf.xlu0
    %v81 = vpop.trf.xlu0
    %v82 = vpop.trf.xlu0
    %v83 = vpop.trf.xlu0
    %v84 = vpop.trf.xlu0
    %v85 = vpop.trf.xlu0
    %v86 = vpop.trf.xlu0
    %v87 = vpop.trf.xlu0
    %v88 = vpop.trf.xlu0
    %v89 = vpop.trf.xlu0
    %v90 = vpop.trf.xlu0
    %vm91 = vcmask 195584
    %v93 = vsel %vm91, %v75, 0
    %v96 = vsel %vm91, %v76, 0
    %v99 = vsel %vm91, %v77, 0
    %v102 = vsel %vm91, %v78, 0
    %104 = vmatprep.subr.mxu0 0.0
    %105 = vmatpush1.msra.mxu0 %v39
    %106 = vmatprep.subr.mxu0 0.0
    %107 = vmatpush1.msra.mxu0 %v40
    %108 = vmatprep.subr.mxu0 0.0
    %109 = vmatpush1.msra.mxu0 %v41
    %110 = vmatprep.subr.mxu0 0.0
    %111 = vmatpush1.msra.mxu0 0.0
    %112 = vmatprep.subr.mxu0 0.0
    %113 = vmatpush1.msra.mxu0 0.0
    %114 = vmatprep.subr.mxu0 0.0
    %115 = vmatpush1.msra.mxu0 0.0
    %116 = vmatprep.subr.mxu0 0.0
    %117 = vmatpush1.msra.mxu0 0.0
    %118 = vmatprep.subr.mxu0 0.0
    %119 = vmatpush1.msra.mxu0 0.0
    %120 = vmatprep.subr.mxu0 0.0
    %121 = vmatpush1.msra.mxu0 0.0
    %122 = vmatprep.subr.mxu0 0.0
    %123 = vmatpush1.msra.mxu0 0.0
    %124 = vmatprep.subr.mxu0 0.0
    %125 = vmatpush1.msra.mxu0 0.0
    %126 = vmatprep.subr.mxu0 0.0
    %127 = vmatpush1.msra.mxu0 0.0
    %128 = vmatprep.subr.mxu0 0.0
    %129 = vmatpush1.msra.mxu0 0.0
    %130 = vmatprep.subr.mxu0 0.0
    %131 = vmatpush1.msra.mxu0 0.0
    %132 = vmatprep.subr.mxu0 0.0
    %133 = vmatpush1.msra.mxu0 0.0
    %134 = vmatprep.subr.mxu0 0.0
    %135 = vmatpush1.msra.mxu0 0.0
    %136 = vmatprep.subr.mxu0 0.0
    %137 = vmatpush1.msra.mxu0 0.0
    %138 = vmatprep.subr.mxu0 0.0
    %139 = vmatpush1.msra.mxu0 0.0
    %140 = vmatprep.subr.mxu0 0.0
    %141 = vmatpush1.msra.mxu0 0.0
    %142 = vmatprep.subr.mxu0 0.0
    %143 = vmatpush1.msra.mxu0 0.0
    %144 = vmatprep.subr.mxu0 0.0
    %145 = vmatpush1.msra.mxu0 0.0
    %146 = vmatprep.subr.mxu0 0.0
    %147 = vmatpush1.msra.mxu0 0.0
    %148 = vmatprep.subr.mxu0 0.0
    %149 = vmatpush1.msra.mxu0 0.0
    %150 = vmatprep.subr.mxu0 0.0
    %151 = vmatpush1.msra.mxu0 0.0
    %152 = vmatprep.subr.mxu0 0.0
    %153 = vmatpush1.msra.mxu0 0.0
    %154 = vmatprep.subr.mxu0 0.0
    %155 = vmatpush1.msra.mxu0 0.0
    %156 = vmatprep.subr.mxu0 0.0
    %157 = vmatpush1.msra.mxu0 0.0
    %158 = vmatprep.subr.mxu0 0.0
    %159 = vmatpush1.msra.mxu0 0.0
    %160 = vmatprep.subr.mxu0 0.0
    %161 = vmatpush1.msra.mxu0 0.0
    %162 = vmatprep.subr.mxu0 0.0
    %163 = vmatpush1.msra.mxu0 0.0
    %164 = vmatprep.subr.mxu0 0.0
    %165 = vmatpush1.msra.mxu0 0.0
    %166 = vmatprep.subr.mxu0 0.0
    %167 = vmatpush1.msra.mxu0 0.0
    %168 = vmatprep.mubr.f32.mxu0 0.0
    %169 = vmatmul.mubr.f32.gmra.mrb[0].mxu0 %v93
    %v170 = vpop.f32.mrb[0].mxu0
    %v171 = vadd.f32 0.0, %v170
    %v172 = vpop.f32.mrb[0].mxu0
    %173 = vmatprep.mubr.f32.mxu0 0.0
    %174 = vmatmul.mubr.f32.gmra.mrb[0].mxu0 %v96
    %v175 = vpop.f32.mrb[0].mxu0
    %v176 = vadd.f32 0.0, %v175
    %v177 = vpop.f32.mrb[0].mxu0
    %178 = vmatprep.mubr.f32.mxu0 0.0
    %179 = vmatmul.mubr.f32.gmra.mrb[0].mxu0 %v99
    %v180 = vpop.f32.mrb[0].mxu0
    %v181 = vadd.f32 0.0, %v180
    %v182 = vpop.f32.mrb[0].mxu0
    %183 = vmatprep.mubr.f32.mxu0 0.0
    %184 = vmatmul.mubr.f32.gmra.mrb[0].mxu0 %v102
    %v185 = vpop.f32.mrb[0].mxu0
    %v186 = vadd.f32 0.0, %v185
    %v187 = vpop.f32.mrb[0].mxu0
    %188 = vdwg.mxu0
    %189 = vst [vmem:[#allocation7] sm:$0xff] %v171
    %190 = vst [vmem:[#allocation7 + $0x8] sm:$0xff] %v176
    %191 = vst [vmem:[#allocation7 + $0x10] sm:$0xff] %v181
    %192 = vst [vmem:[#allocation7 + $0x18] sm:$0xff] %v186
    // Predicated region
    $region18: #{tpu_custom_call.1} parent=1 // pred_check
      _
    $region19: #{tpu_custom_call.1} parent=1 // pred_check_branch
      %194 = sbr.rel (0) target = $region21
    $region20: #{tpu_custom_call.1} parent=1 // pred_region
      %s196 = ssub.s32 512, 512
      %197 = vsyncadd [#allocation4], %s196
      %s198 = sshll.u32 [#allocation7], 4
      %s199 = int_to_ptr.vmem [resolvable:$true] %s198
      %204 = dma.vmem_to_hbm [thread:$0]  %s199, 512, %s2, [#allocation4], 128, 128, 8
    $region21: #{tpu_custom_call.1} parent=1 // pred_fallthru
      _
    // Predicated region
    $region22: #{tpu_custom_call.1} parent=1 // pred_check
      _
    $region23: #{tpu_custom_call.1} parent=1 // pred_check_branch
      %206 = sbr.rel (0) target = $region25
    $region24: #{tpu_custom_call.1} parent=1 // pred_region
      %207 = dma.done [#allocation4], 512
    $region25: #{tpu_custom_call.1} parent=1 // pred_fallthru
      _
    %208 = vsyncpa [#allocation3], 1
    %209 = vsyncpa [#allocation6], 1
    %210 = vsyncpa [#allocation4], 1

</llo_original>
